<compile_context>
chip_gen: v5e
topology: v5e:2x2
jax: 0.10.0
libtpu: 0.0.40
codegen_flags: <defaults>
</compile_context>

<pallas_src>
import functools

import jax
import jax.numpy as jnp
from jax.experimental import pallas as pl
from jax.experimental.pallas import tpu as pltpu


def _round_up(x, m):
    return ((x + m - 1) // m) * m


def _cdiv(a, b):
    return (a + b - 1) // b


# ----------------------------- Pallas kernel ------------------------------ #

def _mlp_kernel(x_ref, w1_ref, b1_ref, w2_ref, b2_ref, w3_ref, b3_ref, o_ref,
                *, output_limit, use_actor, compute_dtype):
    # x arrives f32 from HBM; cast to compute_dtype in-register for the MXU.
    x = x_ref[...].astype(compute_dtype)
    # hidden layer 1: relu(x @ W1 + b1)
    h = jnp.dot(x, w1_ref[...], preferred_element_type=jnp.float32)
    h = jnp.maximum(h + b1_ref[...], 0.0)
    # hidden layer 2: relu(h @ W2 + b2)
    h = jnp.dot(h.astype(compute_dtype), w2_ref[...],
                preferred_element_type=jnp.float32)
    h = jnp.maximum(h + b2_ref[...], 0.0)
    # output layer: identity(h @ W3 + b3)
    y = jnp.dot(h.astype(compute_dtype), w3_ref[...],
                preferred_element_type=jnp.float32) + b3_ref[...]
    if use_actor:
        y = y * output_limit
    o_ref[...] = y.astype(o_ref.dtype)


# --------------------------- one-time param prep --------------------------- #

def prepare_mlp_params(params, compute_dtype=jnp.bfloat16):
    """Cast weights to the MXU compute dtype, biases to f32.  Call once per
    parameter update (not per forward) so the forward wrapper issues no extra
    cast ops."""
    w1, b1, w2, b2, w3, b3 = params
    return (w1.astype(compute_dtype), b1.astype(jnp.float32),
            w2.astype(compute_dtype), b2.astype(jnp.float32),
            w3.astype(compute_dtype), b3.astype(jnp.float32))


# ------------------------------ host wrapper ------------------------------- #

def mlp_forward(x, prepared_params, *, output_limit=1.0, use_actor=False,
                compute_dtype=jnp.bfloat16, block_batch=None,
                min_pallas_batch=256):
    """MLP forward pass.

    x: [B, input_size] float32.  prepared_params: output of prepare_mlp_params.
    Returns [B, output_size] float32.
    """
    w1, b1, w2, b2, w3, b3 = prepared_params
    batch, in_size = x.shape
    h1 = w1.shape[1]
    h2 = w2.shape[1]
    out_size = w3.shape[1]

    # -------- tiny-batch fast path: plain XLA fusion beats kernel launch ----
    if batch < min_pallas_batch:
        xc = x.astype(compute_dtype)
        h = jnp.maximum(
            jnp.dot(xc, w1, preferred_element_type=jnp.float32) + b1, 0.0)
        h = jnp.maximum(
            jnp.dot(h.astype(compute_dtype), w2,
                    preferred_element_type=jnp.float32) + b2, 0.0)
        y = jnp.dot(h.astype(compute_dtype), w3,
                    preferred_element_type=jnp.float32) + b3
        return y * output_limit if use_actor else y

    # ----------------------------- Pallas path ------------------------------
    SUBLANE = 8                       # x / out live in HBM as f32 -> 8-row tile
    batch_sub = _round_up(batch, SUBLANE)

    if block_batch is None:
        target = 4096                 # ~1.5 MiB/step double-buffered (in+out)
        n_steps = _cdiv(batch_sub, target)
        # Force >=2 grid steps when possible so v7x's two TensorCores both get
        # a share of the "parallel" batch axis (no-op cost on v5e/v6e).
        if batch_sub >= 2 * SUBLANE:
            n_steps = max(n_steps, 2)
        block_batch = _round_up(_cdiv(batch_sub, n_steps), SUBLANE)
    block_batch = max(SUBLANE, _round_up(block_batch, SUBLANE))

    batch_pad = _round_up(batch_sub, block_batch)   # at most a few extra rows
    if batch_pad != batch:
        xp = jnp.zeros((batch_pad, in_size), x.dtype).at[:batch, :].set(x)
    else:
        xp = x
    grid = (batch_pad // block_batch,)

    kernel = functools.partial(
        _mlp_kernel, output_limit=output_limit, use_actor=use_actor,
        compute_dtype=compute_dtype)

    # Weights / biases: constant index_map -> DMA'd once, resident in VMEM.
    def resident(shape):
        return pl.BlockSpec(shape, lambda i: (0, 0))

    w_itemsize = jnp.dtype(compute_dtype).itemsize
    weight_elems = in_size * h1 + h1 * h2 + h2 * out_size
    cost = pl.CostEstimate(
        flops=2 * batch_pad * weight_elems,
        transcendentals=0,
        bytes_accessed=(batch_pad * in_size * 4          # x in (f32)
                        + weight_elems * w_itemsize      # weights in
                        + (h1 + h2 + out_size) * 4       # biases in (f32)
                        + batch_pad * out_size * 4),     # y out (f32)
    )

    out = pl.pallas_call(
        kernel,
        out_shape=jax.ShapeDtypeStruct((batch_pad, out_size), jnp.float32),
        grid_spec=pltpu.PrefetchScalarGridSpec(
            num_scalar_prefetch=0,
            grid=grid,
            in_specs=[
                pl.BlockSpec((block_batch, in_size), lambda i: (i, 0)),
                resident((in_size, h1)), resident((1, h1)),
                resident((h1, h2)), resident((1, h2)),
                resident((h2, out_size)), resident((1, out_size)),
            ],
            out_specs=pl.BlockSpec((block_batch, out_size), lambda i: (i, 0)),
        ),
        compiler_params=pltpu.CompilerParams(
            dimension_semantics=("parallel",)),   # shards across v7x's 2 TCs
        cost_estimate=cost,
    )(xp, w1, b1, w2, b2, w3, b3)

    return out[:batch, :]


# ------------------------- deterministic parameters ------------------------ #

def _orthogonal(key, rows, cols, gain):
    """Deterministic orthogonal init (matches nn.init.orthogonal_ semantics)."""
    n, m = max(rows, cols), min(rows, cols)
    a = jax.random.normal(key, (n, m), dtype=jnp.float32)
    q, r = jnp.linalg.qr(a)
    q = q * jnp.sign(jnp.diagonal(r))          # make decomposition unique
    if rows < cols:
        q = q.T
    return gain * q[:rows, :cols]


def make_mlp_params(key, input_size, output_size, hidden_sizes=(32, 32)):
    """Weights stored as [in, out]; biases as [1, out] (zero, like init())."""
    sizes = (input_size,) + tuple(hidden_sizes) + (output_size,)
    gains = [0.1] * len(hidden_sizes) + [1.0]
    params = []
    keys = jax.random.split(key, len(gains))
    for i, (k, gain) in enumerate(zip(keys, gains)):
        in_s, out_s = sizes[i], sizes[i + 1]
        # torch Linear weight is [out, in]; we transpose to [in, out].
        w = _orthogonal(k, out_s, in_s, gain).T
        b = jnp.zeros((1, out_s), dtype=jnp.float32)
        params += [w, b]
    return tuple(params)


# ---------------------------------- main ----------------------------------- #

if __name__ == "__main__":
    input_size = 16
    output_size = 8
    hidden_sizes = (32, 32)

    key = jax.random.PRNGKey(0)
    k_x_small, k_x_big, k_p = jax.random.split(key, 3)
    params = make_mlp_params(k_p, input_size, output_size, hidden_sizes)
    w1, b1, w2, b2, w3, b3 = params

    def ref_fwd(xv):  # pure-JAX reference (exact module semantics, f32)
        h = jnp.maximum(xv @ w1 + b1, 0.0)
        h = jnp.maximum(h @ w2 + b2, 0.0)
        return h @ w3 + b3

    prep_f32 = prepare_mlp_params(params, compute_dtype=jnp.float32)
    prep_bf16 = prepare_mlp_params(params, compute_dtype=jnp.bfloat16)

    # --- small batch (module-scale example) --------------------------------
    x_small = jax.random.normal(k_x_small, (2, input_size), dtype=jnp.float32)

    # Force the Pallas kernel even at batch=2 (exact f32 path): strict check.
    out_small_pallas = jax.block_until_ready(
        mlp_forward(x_small, prep_f32, compute_dtype=jnp.float32,
                    min_pallas_batch=0))
    assert out_small_pallas.shape == (2, output_size)
    assert jnp.allclose(out_small_pallas, ref_fwd(x_small), atol=1e-5, rtol=1e-5)

    # Default path at batch=2 takes the tiny-batch XLA fast path: loose check.
    out_small_fast = jax.block_until_ready(mlp_forward(x_small, prep_bf16))
    assert out_small_fast.shape == (2, output_size)
    assert jnp.allclose(out_small_fast, ref_fwd(x_small), atol=2e-2, rtol=2e-2)

    # --- larger, non-multiple-of-8 batch: exercises padding + 2-step grid ---
    x_big = jax.random.normal(k_x_big, (500, input_size), dtype=jnp.float32)

    out_big_f32 = jax.block_until_ready(
        mlp_forward(x_big, prep_f32, compute_dtype=jnp.float32))
    assert out_big_f32.shape == (500, output_size)
    assert jnp.allclose(out_big_f32, ref_fwd(x_big), atol=1e-5, rtol=1e-5)

    out_big_bf16 = jax.block_until_ready(mlp_forward(x_big, prep_bf16))
    assert out_big_bf16.shape == (500, output_size)
    assert jnp.allclose(out_big_bf16, ref_fwd(x_big), atol=2e-2, rtol=2e-2)

    # Actor path: identity output activation scaled by output_limit.
    out_actor = jax.block_until_ready(
        mlp_forward(x_big, prep_f32, compute_dtype=jnp.float32,
                    output_limit=2.0, use_actor=True))
    assert jnp.allclose(out_actor, 2.0 * ref_fwd(x_big), atol=1e-5, rtol=1e-5)

    print("KERNEL_OK")
</pallas_src>

<mosaic_0001>
module attributes {stable_mosaic.version = 11 : i64} {
  func.func @_mlp_kernel(%arg0: i32, %arg1: memref<8x16xf32, #tpu.memory_space<vmem>>, %arg2: memref<16x32xf32, #tpu.memory_space<vmem>>, %arg3: memref<1x32xf32, #tpu.memory_space<vmem>>, %arg4: memref<32x32xf32, #tpu.memory_space<vmem>>, %arg5: memref<1x32xf32, #tpu.memory_space<vmem>>, %arg6: memref<32x8xf32, #tpu.memory_space<vmem>>, %arg7: memref<1x8xf32, #tpu.memory_space<vmem>>, %arg8: memref<8x8xf32, #tpu.memory_space<vmem>>) attributes {dimension_semantics = [#tpu.dimension_semantics<parallel>], iteration_bounds = array<i64: 1>, scalar_prefetch = 0 : i64, scratch_operands = 0 : i64, tpu.core_type = #tpu.core_type<tc>, window_params = [{transform_indices = @transform_0, window_bounds = array<i64: 8, 16>}, {pipeline_mode = #tpu.pipeline_mode<synchronous>, transform_indices = @transform_1, window_bounds = array<i64: 16, 32>}, {pipeline_mode = #tpu.pipeline_mode<synchronous>, transform_indices = @transform_2, window_bounds = array<i64: 1, 32>}, {pipeline_mode = #tpu.pipeline_mode<synchronous>, transform_indices = @transform_3, window_bounds = array<i64: 32, 32>}, {pipeline_mode = #tpu.pipeline_mode<synchronous>, transform_indices = @transform_4, window_bounds = array<i64: 1, 32>}, {pipeline_mode = #tpu.pipeline_mode<synchronous>, transform_indices = @transform_5, window_bounds = array<i64: 32, 8>}, {pipeline_mode = #tpu.pipeline_mode<synchronous>, transform_indices = @transform_6, window_bounds = array<i64: 1, 8>}, {transform_indices = @transform_7, window_bounds = array<i64: 8, 8>}]} {
    %c0 = arith.constant 0 : index
    %c0_0 = arith.constant 0 : index
    %0 = vector.load %arg1[%c0, %c0_0] : memref<8x16xf32, #tpu.memory_space<vmem>>, vector<8x16xf32>
    %c0_1 = arith.constant 0 : index
    %c0_2 = arith.constant 0 : index
    %1 = vector.load %arg2[%c0_1, %c0_2] : memref<16x32xf32, #tpu.memory_space<vmem>>, vector<16x32xf32>
    %cst = arith.constant dense<0.000000e+00> : vector<8x32xf32>
    %2 = tpu.matmul %0, %1, %cst {dimension_numbers = #tpu.dot_dimension_numbers<[1], [0], [0], [1], [0, 0, 1, 1], [], []>} : vector<8x16xf32>, vector<16x32xf32>, vector<8x32xf32> -> vector<8x32xf32>
    %c0_3 = arith.constant 0 : index
    %c0_4 = arith.constant 0 : index
    %3 = vector.load %arg3[%c0_3, %c0_4] : memref<1x32xf32, #tpu.memory_space<vmem>>, vector<1x32xf32>
    %4 = vector.broadcast %3 : vector<1x32xf32> to vector<8x32xf32>
    %5 = arith.addf %2, %4 : vector<8x32xf32>
    %cst_5 = arith.constant 0.000000e+00 : f32
    %6 = vector.broadcast %cst_5 : f32 to vector<8x32xf32>
    %7 = arith.maximumf %5, %6 : vector<8x32xf32>
    %c0_6 = arith.constant 0 : index
    %c0_7 = arith.constant 0 : index
    %8 = vector.load %arg4[%c0_6, %c0_7] : memref<32x32xf32, #tpu.memory_space<vmem>>, vector<32x32xf32>
    %cst_8 = arith.constant dense<0.000000e+00> : vector<8x32xf32>
    %9 = tpu.matmul %7, %8, %cst_8 {dimension_numbers = #tpu.dot_dimension_numbers<[1], [0], [0], [1], [0, 0, 1, 1], [], []>} : vector<8x32xf32>, vector<32x32xf32>, vector<8x32xf32> -> vector<8x32xf32>
    %c0_9 = arith.constant 0 : index
    %c0_10 = arith.constant 0 : index
    %10 = vector.load %arg5[%c0_9, %c0_10] : memref<1x32xf32, #tpu.memory_space<vmem>>, vector<1x32xf32>
    %11 = vector.broadcast %10 : vector<1x32xf32> to vector<8x32xf32>
    %12 = arith.addf %9, %11 : vector<8x32xf32>
    %cst_11 = arith.constant 0.000000e+00 : f32
    %13 = vector.broadcast %cst_11 : f32 to vector<8x32xf32>
    %14 = arith.maximumf %12, %13 : vector<8x32xf32>
    %c0_12 = arith.constant 0 : index
    %c0_13 = arith.constant 0 : index
    %15 = vector.load %arg6[%c0_12, %c0_13] : memref<32x8xf32, #tpu.memory_space<vmem>>, vector<32x8xf32>
    %cst_14 = arith.constant dense<0.000000e+00> : vector<8x8xf32>
    %16 = tpu.matmul %14, %15, %cst_14 {dimension_numbers = #tpu.dot_dimension_numbers<[1], [0], [0], [1], [0, 0, 1, 1], [], []>} : vector<8x32xf32>, vector<32x8xf32>, vector<8x8xf32> -> vector<8x8xf32>
    %c0_15 = arith.constant 0 : index
    %c0_16 = arith.constant 0 : index
    %17 = vector.load %arg7[%c0_15, %c0_16] : memref<1x8xf32, #tpu.memory_space<vmem>>, vector<1x8xf32>
    %18 = vector.broadcast %17 : vector<1x8xf32> to vector<8x8xf32>
    %19 = arith.addf %16, %18 : vector<8x8xf32>
    %c0_17 = arith.constant 0 : index
    %c0_18 = arith.constant 0 : index
    %20 = vector.load %arg8[%c0_17, %c0_18] : memref<8x8xf32, #tpu.memory_space<vmem>>, vector<8x8xf32>
    tpu.vector_store %arg8[%c0_17, %c0_18], %19 {strides = array<i32>} : memref<8x8xf32, #tpu.memory_space<vmem>>, vector<8x8xf32>,
    return
  }
  func.func @transform_0(%arg0: i32) -> (i32, i32) {
    %c0_i32 = arith.constant 0 : i32
    %c0_i32_0 = arith.constant 0 : i32
    return %arg0, %c0_i32 : i32, i32
  }
  func.func @transform_1(%arg0: i32) -> (i32, i32) {
    %c0_i32 = arith.constant 0 : i32
    %c0_i32_0 = arith.constant 0 : i32
    %c0_i32_1 = arith.constant 0 : i32
    return %c0_i32, %c0_i32_0 : i32, i32
  }
  func.func @transform_2(%arg0: i32) -> (i32, i32) {
    %c0_i32 = arith.constant 0 : i32
    %c0_i32_0 = arith.constant 0 : i32
    %c0_i32_1 = arith.constant 0 : i32
    return %c0_i32, %c0_i32_0 : i32, i32
  }
  func.func @transform_3(%arg0: i32) -> (i32, i32) {
    %c0_i32 = arith.constant 0 : i32
    %c0_i32_0 = arith.constant 0 : i32
    %c0_i32_1 = arith.constant 0 : i32
    return %c0_i32, %c0_i32_0 : i32, i32
  }
  func.func @transform_4(%arg0: i32) -> (i32, i32) {
    %c0_i32 = arith.constant 0 : i32
    %c0_i32_0 = arith.constant 0 : i32
    %c0_i32_1 = arith.constant 0 : i32
    return %c0_i32, %c0_i32_0 : i32, i32
  }
  func.func @transform_5(%arg0: i32) -> (i32, i32) {
    %c0_i32 = arith.constant 0 : i32
    %c0_i32_0 = arith.constant 0 : i32
    %c0_i32_1 = arith.constant 0 : i32
    return %c0_i32, %c0_i32_0 : i32, i32
  }
  func.func @transform_6(%arg0: i32) -> (i32, i32) {
    %c0_i32 = arith.constant 0 : i32
    %c0_i32_0 = arith.constant 0 : i32
    %c0_i32_1 = arith.constant 0 : i32
    return %c0_i32, %c0_i32_0 : i32, i32
  }
  func.func @transform_7(%arg0: i32) -> (i32, i32) {
    %c0_i32 = arith.constant 0 : i32
    %c0_i32_0 = arith.constant 0 : i32
    return %arg0, %c0_i32 : i32, i32
  }
}

</mosaic_0001>

<llo_original>
// kernel: tpu_custom_call.1
$region0: #{tpu_custom_call.1}
  #allocation0 [shape = 'u32[]', space=smem, size = 0x4, offset = 0x4, fixed_abs, tag = 'smem constant byte address 0x4 - core index']
  #allocation1 [shape = 'u32[72,128]{1,0:T(1,128)}', space=vmem, size = 0x9000, scoped, tag = 'internal scratch']
  %s0 = inlined_call_operand.vmem [shape: f32[8,16], index: 0, kind: input, shape index: {}]
  %s1 = inlined_call_operand.hbm [shape: f32[16,32], index: 1, kind: input, shape index: {}]
  %s2 = inlined_call_operand.vmem [shape: f32[1,32], index: 2, kind: input, shape index: {}]
  %s3 = inlined_call_operand.vmem [shape: f32[32,32], index: 3, kind: input, shape index: {}]
  %s4 = inlined_call_operand.vmem [shape: f32[1,32], index: 4, kind: input, shape index: {}]
  %s5 = inlined_call_operand.vmem [shape: f32[32,8], index: 5, kind: input, shape index: {}]
  %s6 = inlined_call_operand.vmem [shape: f32[1,8], index: 6, kind: input, shape index: {}]
  %s7 = inlined_call_operand.hbm [shape: f32[8,8], index: 7, kind: output, shape index: {}]
  %s8 = sld [smem:[#allocation0]]
  $region42: #{tpu_custom_call.1} parent=0
    _
  %s10 = ssub.s32 1, %s8
  %s11 = scalar_select 0, %s10, %s8
  $region1: #{tpu_custom_call.1} parent=0
    #allocation2 [shape = 'u8[8192]{0}', space=vmem, size = 0x2000, scoped, tag = 'input window, operand 1, single buffered']
    #allocation3 [shape = 's32[1]{0}', space=sflag, size = 0x4, scoped, tag = 'scoped memory for tpu_custom_call.1']
    #allocation4 [shape = 's32[1]{0}', space=sflag, size = 0x4, scoped, tag = 'scoped memory for tpu_custom_call.1']
    #allocation5 [shape = 'u8[4096]{0}', space=vmem, size = 0x1000, scoped, tag = 'output window, operand 0, single buffered']
    %12 = vsyncpa [#allocation3], 0
    %13 = vsyncpa [#allocation4], 0
    // Predicated region
    $region2: #{tpu_custom_call.1} parent=1 // pred_check
      _
    $region3: #{tpu_custom_call.1} parent=1 // pred_check_branch
      %15 = sbr.rel (0) target = $region5
    $region4: #{tpu_custom_call.1} parent=1 // pred_region
      _
    $region5: #{tpu_custom_call.1} parent=1 // pred_fallthru
      _
    // Predicated region
    $region6: #{tpu_custom_call.1} parent=1 // pred_check
      _
    $region7: #{tpu_custom_call.1} parent=1 // pred_check_branch
      %17 = sbr.rel (0) target = $region9
    $region8: #{tpu_custom_call.1} parent=1 // pred_region
      %19 = vsyncadd [#allocation3], 0
      %s20 = sshll.u32 %s1, 4
      %s21 = int_to_ptr.hbm [resolvable:$true] %s20
      %s22 = sshll.u32 [#allocation2], 4
      %s23 = int_to_ptr.vmem [resolvable:$true] %s22
      %28 = dma.hbm_to_vmem [thread:$0]  %s21, 256, %s23, [#allocation3], 128, 128, 8
    $region9: #{tpu_custom_call.1} parent=1 // pred_fallthru
      _
    // Predicated region
    $region10: #{tpu_custom_call.1} parent=1 // pred_check
      _
    $region11: #{tpu_custom_call.1} parent=1 // pred_check_branch
      %30 = sbr.rel (0) target = $region13
    $region12: #{tpu_custom_call.1} parent=1 // pred_region
      _
    $region13: #{tpu_custom_call.1} parent=1 // pred_fallthru
      _
    // Predicated region
    $region14: #{tpu_custom_call.1} parent=1 // pred_check
      _
    $region15: #{tpu_custom_call.1} parent=1 // pred_check_branch
      %32 = sbr.rel (0) target = $region17
    $region16: #{tpu_custom_call.1} parent=1 // pred_region
      _
    $region17: #{tpu_custom_call.1} parent=1 // pred_fallthru
      _
    // Predicated region
    $region18: #{tpu_custom_call.1} parent=1 // pred_check
      _
    $region19: #{tpu_custom_call.1} parent=1 // pred_check_branch
      %34 = sbr.rel (0) target = $region21
    $region20: #{tpu_custom_call.1} parent=1 // pred_region
      _
    $region21: #{tpu_custom_call.1} parent=1 // pred_fallthru
      _
    // Predicated region
    $region22: #{tpu_custom_call.1} parent=1 // pred_check
      _
    $region23: #{tpu_custom_call.1} parent=1 // pred_check_branch
      %36 = sbr.rel (0) target = $region25
    $region24: #{tpu_custom_call.1} parent=1 // pred_region
      _
    $region25: #{tpu_custom_call.1} parent=1 // pred_fallthru
      _
    // Predicated region
    $region26: #{tpu_custom_call.1} parent=1 // pred_check
      _
    $region27: #{tpu_custom_call.1} parent=1 // pred_check_branch
      %38 = sbr.rel (0) target = $region29
    $region28: #{tpu_custom_call.1} parent=1 // pred_region
      _
    $region29: #{tpu_custom_call.1} parent=1 // pred_fallthru
      _
    // Predicated region
    $region30: #{tpu_custom_call.1} parent=1 // pred_check
      _
    $region31: #{tpu_custom_call.1} parent=1 // pred_check_branch
      %40 = sbr.rel (0) target = $region33
    $region32: #{tpu_custom_call.1} parent=1 // pred_region
      %42 = dma.done [#allocation3], 256
    $region33: #{tpu_custom_call.1} parent=1 // pred_fallthru
      _
    %v43 = vld [vmem:[%s0] sm:$0xff]
    %v44 = vld [vmem:[#allocation2] sm:$0xff]
    %v45 = vld [vmem:[#allocation2 + $0x8] sm:$0xff]
    %v46 = vld [vmem:[%s2] sm:$0x1]
    %v48 = vperm.slane %v46, 0
    %vm50 = vcmask 130048
    %v52 = vsel %vm50, %v43, 0
    %54 = vmatpush.msra.mxu0 0.0
    %55 = vmatpush.msra.mxu0 0.0
    %56 = vmatpush.msra.mxu0 0.0
    %57 = vmatpush.msra.mxu0 0.0
    %58 = vmatpush.msra.mxu0 0.0
    %59 = vmatpush.msra.mxu0 0.0
    %60 = vmatpush.msra.mxu0 0.0
    %61 = vmatpush.msra.mxu0 0.0
    %62 = vmatpush.msra.mxu0 0.0
    %63 = vmatpush.msra.mxu0 0.0
    %64 = vmatpush.msra.mxu0 0.0
    %65 = vmatpush.msra.mxu0 0.0
    %66 = vmatpush.msra.mxu0 0.0
    %67 = vmatpush.msra.mxu0 0.0
    %68 = vmatpush.msra.mxu0 %v45
    %69 = vmatpush.msra.mxu0 %v44
    %70 = vmatmul.f32.gmra.mxu0 %v52
    %v71 = vpop.f32.mrf.mxu0
    %v72 = vadd.f32 %v48, %v71
    %73 = vdwg.mxu0
    %v74 = vmax.f32 %v72, 0.0
    %v75 = vld [vmem:[%s3] sm:$0xff]
    %v76 = vld [vmem:[%s3 + $0x8] sm:$0xff]
    %v77 = vld [vmem:[%s3 + $0x10] sm:$0xff]
    %v78 = vld [vmem:[%s3 + $0x18] sm:$0xff]
    %v79 = vld [vmem:[%s4] sm:$0x1]
    %v81 = vperm.slane %v79, 0
    %vm83 = vcmask 261120
    %v85 = vsel %vm83, %v74, 0
    %87 = vmatpush.msra.mxu0 0.0
    %88 = vmatpush.msra.mxu0 0.0
    %89 = vmatpush.msra.mxu0 0.0
    %90 = vmatpush.msra.mxu0 0.0
    %91 = vmatpush.msra.mxu0 0.0
    %92 = vmatpush.msra.mxu0 0.0
    %93 = vmatpush.msra.mxu0 0.0
    %94 = vmatpush.msra.mxu0 0.0
    %95 = vmatpush.msra.mxu0 0.0
    %96 = vmatpush.msra.mxu0 0.0
    %97 = vmatpush.msra.mxu0 0.0
    %98 = vmatpush.msra.mxu0 0.0
    %99 = vmatpush.msra.mxu0 %v78
    %100 = vmatpush.msra.mxu0 %v77
    %101 = vmatpush.msra.mxu0 %v76
    %102 = vmatpush.msra.mxu0 %v75
    %103 = vmatmul.f32.gmra.mxu0 %v85
    %v104 = vpop.f32.mrf.mxu0
    %v105 = vadd.f32 %v81, %v104
    %106 = vdwg.mxu0
    %v107 = vmax.f32 %v105, 0.0
    %v108 = vld [vmem:[%s5] sm:$0xff]
    %v109 = vld [vmem:[%s5 + $0x8] sm:$0xff]
    %v110 = vld [vmem:[%s5 + $0x10] sm:$0xff]
    %v111 = vld [vmem:[%s5 + $0x18] sm:$0xff]
    %v112 = vld [vmem:[%s6] sm:$0x1]
    %v114 = vperm.slane %v112, 0
    %v117 = vsel %vm83, %v107, 0
    %119 = vmatpush.msra.mxu0 0.0
    %120 = vmatpush.msra.mxu0 0.0
    %121 = vmatpush.msra.mxu0 0.0
    %122 = vmatpush.msra.mxu0 0.0
    %123 = vmatpush.msra.mxu0 0.0
    %124 = vmatpush.msra.mxu0 0.0
    %125 = vmatpush.msra.mxu0 0.0
    %126 = vmatpush.msra.mxu0 0.0
    %127 = vmatpush.msra.mxu0 0.0
    %128 = vmatpush.msra.mxu0 0.0
    %129 = vmatpush.msra.mxu0 0.0
    %130 = vmatpush.msra.mxu0 0.0
    %131 = vmatpush.msra.mxu0 %v111
    %132 = vmatpush.msra.mxu0 %v110
    %133 = vmatpush.msra.mxu0 %v109
    %134 = vmatpush.msra.mxu0 %v108
    %135 = vmatmul.f32.gmra.mxu0 %v117
    %v136 = vpop.f32.mrf.mxu0
    %v137 = vadd.f32 %v114, %v136
    %138 = vdwg.mxu0
    %vm139 = vcmask 64512
    %140 = vst.msk [vmem:[#allocation5] sm:$0xff] %vm139, %v137
    // Predicated region
    $region34: #{tpu_custom_call.1} parent=1 // pred_check
      _
    $region35: #{tpu_custom_call.1} parent=1 // pred_check_branch
      %142 = sbr.rel (0) target = $region37
    $region36: #{tpu_custom_call.1} parent=1 // pred_region
      %144 = vsyncadd [#allocation4], 0
      %s146 = sshll.u32 [#allocation5], 4
      %s147 = int_to_ptr.vmem [resolvable:$true] %s146
      %s148 = sshll.u32 %s7, 4
      %s149 = int_to_ptr.hbm [resolvable:$true] %s148
      %151 = dma.vmem_to_hbm [thread:$0]  %s147, 128, %s149, [#allocation4]
    $region37: #{tpu_custom_call.1} parent=1 // pred_fallthru
      _
    // Predicated region
    $region38: #{tpu_custom_call.1} parent=1 // pred_check
      _
    $region39: #{tpu_custom_call.1} parent=1 // pred_check_branch
      %153 = sbr.rel (0) target = $region41
    $region40: #{tpu_custom_call.1} parent=1 // pred_region
      %155 = dma.done [#allocation4], 128
    $region41: #{tpu_custom_call.1} parent=1 // pred_fallthru
      _
    %156 = vsyncpa [#allocation3], 1
    %157 = vsyncpa [#allocation4], 1

</llo_original>
